<compile_context>
chip_gen: v7x
topology: tpu7x:2x2x1
jax: 0.10.0
libtpu: 0.0.40
codegen_flags: <defaults>
</compile_context>

<pallas_src>
import jax
import jax.numpy as jnp
from jax.experimental import pallas as pl
from jax.experimental.pallas import tpu as pltpu


def _value_fwd_kernel(x_ref, wc_ref, w1_ref, b1_ref, w2_ref, s_ref, o_ref):
    # x_ref : (TB, C, P)  native dtype (e.g. bf16), P = H*W = outd
    # wc_ref: (C, 1)      conv weight with BN scale folded in (f32)
    # w1_ref: (P, HSZ)    Linear1 weight, transposed (lane-dense)
    # b1_ref: (1, HSZ)    Linear1 bias
    # w2_ref: (HSZ, 1)    Linear2 weight, transposed
    # s_ref : (2,) SMEM   [folded conv/BN bias, Linear2 bias]
    # o_ref : (TB, 1)     f32 output
    x = x_ref[...].astype(jnp.float32)                       # cast in-kernel
    wc = wc_ref[...].astype(jnp.float32)                     # (C, 1)

    # 1x1 conv (K=1) with BN folded: z[b, p] = sum_c x[b, c, p] * wc[c]
    z = jnp.sum(x * wc[None, :, :], axis=1)                  # (TB, P)
    v = jnp.maximum(z + s_ref[0], 0.0)                       # ReLU  (TB, outd)

    h = jnp.dot(v, w1_ref[...].astype(jnp.float32),
                preferred_element_type=jnp.float32)          # (TB, HSZ)  MXU
    h = jnp.maximum(h + b1_ref[...].astype(jnp.float32), 0.0)

    y = jnp.dot(h, w2_ref[...].astype(jnp.float32),
                preferred_element_type=jnp.float32)          # (TB, 1)
    o_ref[...] = jnp.tanh(y + s_ref[1]).astype(o_ref.dtype)


def value_forward(x, params, *, tb=None, interpret=False):
    """Forward pass of the AlphaGo Value head. Returns (B, 1) float32."""
    B, C, H, W = x.shape
    P = H * W

    conv_w = jnp.asarray(params["conv_w"], jnp.float32)       # (K, C, 1, 1)
    K = conv_w.shape[0]
    if K != 1:
        raise NotImplementedError("value_forward supports kernels=1 only")

    conv_b = jnp.asarray(params["conv_b"], jnp.float32)       # (K,)
    gamma = jnp.asarray(params["bn_gamma"], jnp.float32)
    beta = jnp.asarray(params["bn_beta"], jnp.float32)
    mean = jnp.asarray(params["bn_mean"], jnp.float32)
    var = jnp.asarray(params["bn_var"], jnp.float32)
    eps = jnp.float32(params["bn_eps"])

    # Fold conv bias + BN (eval mode) into a per-channel scale and a scalar shift.
    scale = gamma / jnp.sqrt(var + eps)                        # (K,)
    wc = (conv_w[0, :, 0, 0] * scale[0]).reshape(C, 1)          # (C, 1)
    bc = (conv_b[0] - mean[0]) * scale[0] + beta[0]             # scalar

    w1 = jnp.asarray(params["w1"], jnp.float32)                 # (hsz, outd)
    b1 = jnp.asarray(params["b1"], jnp.float32)                 # (hsz,)
    w2 = jnp.asarray(params["w2"], jnp.float32)                 # (1, hsz)
    b2 = jnp.asarray(params["b2"], jnp.float32)                 # (1,)
    hsz, outd = w1.shape
    assert outd == K * P, (outd, K, P)

    w1t = w1.T                                                  # (outd, hsz)
    b1r = b1.reshape(1, hsz)
    w2t = w2.T                                                  # (hsz, 1)
    scalars = jnp.stack([bc, b2[0]])                            # (2,) f32

    x3 = x.reshape(B, C, P)                                     # free reshape, native dtype

    if tb is None:
        # Largest batch tile whose double-buffered x slab fits a conservative
        # VMEM budget (sized for v7x's smaller scoped VMEM).
        budget = 8 * 1024 * 1024
        per_row = 2 * C * P * x3.dtype.itemsize
        tb = max(1, min(B, budget // max(per_row, 1)))
    if tb < B:
        tb = max(8, (tb // 8) * 8)                              # sublane-aligned tiles
    tb = int(min(tb, B))
    grid = (pl.cdiv(B, tb),)

    flops = 2 * B * (C * P + P * hsz + hsz)
    bytes_accessed = (x3.size * x3.dtype.itemsize
                      + (wc.size + w1t.size + b1r.size + w2t.size + scalars.size) * 4
                      + B * 4)
    cost = pl.CostEstimate(flops=flops, transcendentals=B,
                           bytes_accessed=bytes_accessed)

    out = pl.pallas_call(
        _value_fwd_kernel,
        out_shape=jax.ShapeDtypeStruct((B, 1), jnp.float32),
        grid=grid,
        in_specs=[
            pl.BlockSpec((tb, C, P), lambda i: (i, 0, 0)),       # x, batch-tiled
            pl.BlockSpec(memory_space=pltpu.VMEM),               # wc (whole)
            pl.BlockSpec(memory_space=pltpu.VMEM),               # w1t (whole)
            pl.BlockSpec(memory_space=pltpu.VMEM),               # b1 (whole)
            pl.BlockSpec(memory_space=pltpu.VMEM),               # w2t (whole)
            pl.BlockSpec(memory_space=pltpu.SMEM),               # scalar biases
        ],
        out_specs=pl.BlockSpec((tb, 1), lambda i: (i, 0)),
        compiler_params=pltpu.CompilerParams(
            dimension_semantics=("parallel",)),
        cost_estimate=cost,
        interpret=interpret,
    )(x3, wc, w1t, b1r, w2t, scalars)
    return out


def _reference(x, params):
    """Pure-JAX reference of Value.forward (eval-mode BatchNorm)."""
    xf = jnp.asarray(x, jnp.float32)
    conv_w = jnp.asarray(params["conv_w"], jnp.float32)
    conv_b = jnp.asarray(params["conv_b"], jnp.float32)
    gamma = jnp.asarray(params["bn_gamma"], jnp.float32)
    beta = jnp.asarray(params["bn_beta"], jnp.float32)
    mean = jnp.asarray(params["bn_mean"], jnp.float32)
    var = jnp.asarray(params["bn_var"], jnp.float32)
    eps = jnp.float32(params["bn_eps"])
    w1 = jnp.asarray(params["w1"], jnp.float32)
    b1 = jnp.asarray(params["b1"], jnp.float32)
    w2 = jnp.asarray(params["w2"], jnp.float32)
    b2 = jnp.asarray(params["b2"], jnp.float32)

    z = jnp.einsum("bchw,kc->bkhw", xf, conv_w[:, :, 0, 0])
    z = z + conv_b[None, :, None, None]
    z = (z - mean[None, :, None, None]) / jnp.sqrt(var[None, :, None, None] + eps)
    z = z * gamma[None, :, None, None] + beta[None, :, None, None]
    z = jnp.maximum(z, 0.0)
    v = z.reshape(xf.shape[0], -1)
    h = jnp.maximum(v @ w1.T + b1, 0.0)
    return jnp.tanh(h @ w2.T + b2)


if __name__ == "__main__":
    key = jax.random.PRNGKey(0)
    ks = jax.random.split(key, 10)

    # Small shapes consistent with the module: ind=8 channels, 8x8 board,
    # outd = kernels * H * W = 64, hidden size 32, batch 4.
    B, C, H, W = 4, 8, 8, 8
    K = 1
    outd = K * H * W
    hsz = 32

    # Activations kept in bf16 (native dtype); cast to f32 happens in-kernel.
    x = jax.random.normal(ks[0], (B, C, H, W), jnp.float32).astype(jnp.bfloat16)

    params = {
        "conv_w": jax.random.normal(ks[1], (K, C, 1, 1), jnp.float32) * 0.1,
        "conv_b": jax.random.normal(ks[2], (K,), jnp.float32) * 0.1,
        "bn_gamma": jnp.ones((K,), jnp.float32),
        "bn_beta": jnp.zeros((K,), jnp.float32),
        "bn_mean": jax.random.normal(ks[3], (K,), jnp.float32) * 0.1,
        "bn_var": jax.random.uniform(ks[4], (K,), jnp.float32, 0.5, 1.5),
        "bn_eps": 1e-5,
        "w1": jax.random.uniform(ks[5], (hsz, outd), jnp.float32, -0.1, 0.1),
        "b1": jax.random.normal(ks[6], (hsz,), jnp.float32) * 0.1,
        "w2": jax.random.uniform(ks[7], (1, hsz), jnp.float32, -0.1, 0.1),
        "b2": jax.random.normal(ks[8], (1,), jnp.float32) * 0.1,
    }

    out = value_forward(x, params)
    jax.block_until_ready(out)

    ref = _reference(x, params)
    assert out.shape == (B, 1), out.shape
    assert jnp.allclose(out, ref, rtol=5e-3, atol=5e-3), (out, ref)

    print("KERNEL_OK")
</pallas_src>

<mosaic_0001>
module attributes {stable_mosaic.version = 11 : i64} {
  func.func @_value_fwd_kernel(%arg0: i32, %arg1: memref<4x8x64xbf16, #tpu.memory_space<vmem>>, %arg2: memref<8x1xf32, #tpu.memory_space<vmem>>, %arg3: memref<64x32xf32, #tpu.memory_space<vmem>>, %arg4: memref<1x32xf32, #tpu.memory_space<vmem>>, %arg5: memref<32x1xf32, #tpu.memory_space<vmem>>, %arg6: memref<2xf32, #tpu.memory_space<smem>>, %arg7: memref<4x1xf32, #tpu.memory_space<vmem>>) attributes {dimension_semantics = [#tpu.dimension_semantics<parallel>], iteration_bounds = array<i64: 1>, scalar_prefetch = 0 : i64, scratch_operands = 0 : i64, tpu.core_type = #tpu.core_type<tc>, window_params = [{transform_indices = @transform_0, window_bounds = array<i64: 4, 8, 64>}, {pipeline_mode = #tpu.pipeline_mode<synchronous>, transform_indices = @transform_1, window_bounds = array<i64: 8, 1>}, {pipeline_mode = #tpu.pipeline_mode<synchronous>, transform_indices = @transform_2, window_bounds = array<i64: 64, 32>}, {pipeline_mode = #tpu.pipeline_mode<synchronous>, transform_indices = @transform_3, window_bounds = array<i64: 1, 32>}, {pipeline_mode = #tpu.pipeline_mode<synchronous>, transform_indices = @transform_4, window_bounds = array<i64: 32, 1>}, {transform_indices = @transform_5, window_bounds = array<i64: 2>}, {transform_indices = @transform_6, window_bounds = array<i64: 4, 1>}]} {
    %c0 = arith.constant 0 : index
    %c0_0 = arith.constant 0 : index
    %c0_1 = arith.constant 0 : index
    %0 = vector.load %arg1[%c0, %c0_0, %c0_1] : memref<4x8x64xbf16, #tpu.memory_space<vmem>>, vector<4x8x64xbf16>
    %1 = arith.extf %0 : vector<4x8x64xbf16> to vector<4x8x64xf32>
    %c0_2 = arith.constant 0 : index
    %c0_3 = arith.constant 0 : index
    %2 = vector.load %arg2[%c0_2, %c0_3] : memref<8x1xf32, #tpu.memory_space<vmem>>, vector<8x1xf32>
    %3 = vector.shape_cast %2 : vector<8x1xf32> to vector<1x8x1xf32>
    %4 = vector.broadcast %3 : vector<1x8x1xf32> to vector<4x8x64xf32>
    %5 = arith.mulf %1, %4 : vector<4x8x64xf32>
    %cst = arith.constant dense<0.000000e+00> : vector<4x64xf32>
    %6 = vector.multi_reduction <add>, %5, %cst [1] : vector<4x8x64xf32> to vector<4x64xf32>
    %c0_4 = arith.constant 0 : index
    %7 = memref.load %arg6[%c0_4] : memref<2xf32, #tpu.memory_space<smem>>
    %8 = vector.broadcast %7 : f32 to vector<4x64xf32>
    %9 = arith.addf %6, %8 : vector<4x64xf32>
    %cst_5 = arith.constant 0.000000e+00 : f32
    %10 = vector.broadcast %cst_5 : f32 to vector<4x64xf32>
    %11 = arith.maximumf %9, %10 : vector<4x64xf32>
    %c0_6 = arith.constant 0 : index
    %c0_7 = arith.constant 0 : index
    %12 = vector.load %arg3[%c0_6, %c0_7] : memref<64x32xf32, #tpu.memory_space<vmem>>, vector<64x32xf32>
    %cst_8 = arith.constant dense<0.000000e+00> : vector<4x32xf32>
    %13 = tpu.matmul %11, %12, %cst_8 {dimension_numbers = #tpu.dot_dimension_numbers<[1], [0], [0], [1], [0, 0, 1, 1], [], []>} : vector<4x64xf32>, vector<64x32xf32>, vector<4x32xf32> -> vector<4x32xf32>
    %c0_9 = arith.constant 0 : index
    %c0_10 = arith.constant 0 : index
    %14 = vector.load %arg4[%c0_9, %c0_10] : memref<1x32xf32, #tpu.memory_space<vmem>>, vector<1x32xf32>
    %15 = vector.broadcast %14 : vector<1x32xf32> to vector<4x32xf32>
    %16 = arith.addf %13, %15 : vector<4x32xf32>
    %cst_11 = arith.constant 0.000000e+00 : f32
    %17 = vector.broadcast %cst_11 : f32 to vector<4x32xf32>
    %18 = arith.maximumf %16, %17 : vector<4x32xf32>
    %c0_12 = arith.constant 0 : index
    %c0_13 = arith.constant 0 : index
    %19 = vector.load %arg5[%c0_12, %c0_13] : memref<32x1xf32, #tpu.memory_space<vmem>>, vector<32x1xf32>
    %cst_14 = arith.constant dense<0.000000e+00> : vector<4x1xf32>
    %20 = tpu.matmul %18, %19, %cst_14 {dimension_numbers = #tpu.dot_dimension_numbers<[1], [0], [0], [1], [0, 0, 1, 1], [], []>} : vector<4x32xf32>, vector<32x1xf32>, vector<4x1xf32> -> vector<4x1xf32>
    %c1 = arith.constant 1 : index
    %21 = memref.load %arg6[%c1] : memref<2xf32, #tpu.memory_space<smem>>
    %22 = vector.broadcast %21 : f32 to vector<4x1xf32>
    %23 = arith.addf %20, %22 : vector<4x1xf32>
    %24 = math.tanh %23 : vector<4x1xf32>
    %c0_15 = arith.constant 0 : index
    %c0_16 = arith.constant 0 : index
    %25 = vector.load %arg7[%c0_15, %c0_16] : memref<4x1xf32, #tpu.memory_space<vmem>>, vector<4x1xf32>
    tpu.vector_store %arg7[%c0_15, %c0_16], %24 {strides = array<i32>} : memref<4x1xf32, #tpu.memory_space<vmem>>, vector<4x1xf32>,
    return
  }
  func.func @transform_0(%arg0: i32) -> (i32, i32, i32) {
    %c0_i32 = arith.constant 0 : i32
    %c0_i32_0 = arith.constant 0 : i32
    %c0_i32_1 = arith.constant 0 : i32
    return %arg0, %c0_i32, %c0_i32_0 : i32, i32, i32
  }
  func.func @transform_1(%arg0: i32) -> (i32, i32) {
    %c0_i32 = arith.constant 0 : i32
    %c0_i32_0 = arith.constant 0 : i32
    %c0_i32_1 = arith.constant 0 : i32
    return %c0_i32, %c0_i32_0 : i32, i32
  }
  func.func @transform_2(%arg0: i32) -> (i32, i32) {
    %c0_i32 = arith.constant 0 : i32
    %c0_i32_0 = arith.constant 0 : i32
    %c0_i32_1 = arith.constant 0 : i32
    return %c0_i32, %c0_i32_0 : i32, i32
  }
  func.func @transform_3(%arg0: i32) -> (i32, i32) {
    %c0_i32 = arith.constant 0 : i32
    %c0_i32_0 = arith.constant 0 : i32
    %c0_i32_1 = arith.constant 0 : i32
    return %c0_i32, %c0_i32_0 : i32, i32
  }
  func.func @transform_4(%arg0: i32) -> (i32, i32) {
    %c0_i32 = arith.constant 0 : i32
    %c0_i32_0 = arith.constant 0 : i32
    %c0_i32_1 = arith.constant 0 : i32
    return %c0_i32, %c0_i32_0 : i32, i32
  }
  func.func @transform_5(%arg0: i32) -> i32 {
    %c0_i32 = arith.constant 0 : i32
    %c0_i32_0 = arith.constant 0 : i32
    return %c0_i32 : i32
  }
  func.func @transform_6(%arg0: i32) -> (i32, i32) {
    %c0_i32 = arith.constant 0 : i32
    %c0_i32_0 = arith.constant 0 : i32
    return %arg0, %c0_i32 : i32, i32
  }
}

</mosaic_0001>

<llo_original>
// kernel: tpu_custom_call.1
$region0: #{tpu_custom_call.1}
  #allocation0 [shape = 'u32[]', space=smem, size = 0x4, offset = 0x4, fixed_abs, tag = 'smem constant byte address 0x4 - core index']
  #allocation1 [shape = 'u32[144,128]{1,0:T(1,128)}', space=vmem, size = 0x12000, scoped, tag = 'internal scratch']
  %s0 = inlined_call_operand.vmem [shape: bf16[4,8,64], index: 0, kind: input, shape index: {}]
  %s1 = inlined_call_operand.vmem [shape: f32[8,1], index: 1, kind: input, shape index: {}]
  %s2 = inlined_call_operand.vmem [shape: f32[64,32], index: 2, kind: input, shape index: {}]
  %s3 = inlined_call_operand.vmem [shape: f32[1,32], index: 3, kind: input, shape index: {}]
  %s4 = inlined_call_operand.vmem [shape: f32[32,1], index: 4, kind: input, shape index: {}]
  %s5 = inlined_call_operand.vmem [shape: f32[2], index: 5, kind: input, shape index: {}]
  %s6 = inlined_call_operand.vmem [shape: f32[4,1], index: 6, kind: output, shape index: {}]
  %s7 = sld [smem:[#allocation0]]
  $region38: #{tpu_custom_call.1} parent=0
    _
  %s9 = ssub.s32 1, %s7
  %s10 = scalar_select 0, %s9, %s7
  $region1: #{tpu_custom_call.1} parent=0
    #allocation2 [shape = 'u8[512]{0}', space=smem, size = 0x200, scoped, tag = 'input window, operand 5, single buffered']
    #allocation3 [shape = 's32[1]{0}', space=sflag, size = 0x4, scoped, tag = 'scoped memory for tpu_custom_call.1']
    %11 = vsyncpa [#allocation3], 0
    // Predicated region
    $region2: #{tpu_custom_call.1} parent=1 // pred_check
      _
    $region3: #{tpu_custom_call.1} parent=1 // pred_check_branch
      %13 = sbr.rel (0) target = $region5
    $region4: #{tpu_custom_call.1} parent=1 // pred_region
      _
    $region5: #{tpu_custom_call.1} parent=1 // pred_fallthru
      _
    // Predicated region
    $region6: #{tpu_custom_call.1} parent=1 // pred_check
      _
    $region7: #{tpu_custom_call.1} parent=1 // pred_check_branch
      %15 = sbr.rel (0) target = $region9
    $region8: #{tpu_custom_call.1} parent=1 // pred_region
      _
    $region9: #{tpu_custom_call.1} parent=1 // pred_fallthru
      _
    // Predicated region
    $region10: #{tpu_custom_call.1} parent=1 // pred_check
      _
    $region11: #{tpu_custom_call.1} parent=1 // pred_check_branch
      %17 = sbr.rel (0) target = $region13
    $region12: #{tpu_custom_call.1} parent=1 // pred_region
      _
    $region13: #{tpu_custom_call.1} parent=1 // pred_fallthru
      _
    // Predicated region
    $region14: #{tpu_custom_call.1} parent=1 // pred_check
      _
    $region15: #{tpu_custom_call.1} parent=1 // pred_check_branch
      %19 = sbr.rel (0) target = $region17
    $region16: #{tpu_custom_call.1} parent=1 // pred_region
      _
    $region17: #{tpu_custom_call.1} parent=1 // pred_fallthru
      _
    // Predicated region
    $region18: #{tpu_custom_call.1} parent=1 // pred_check
      _
    $region19: #{tpu_custom_call.1} parent=1 // pred_check_branch
      %21 = sbr.rel (0) target = $region21
    $region20: #{tpu_custom_call.1} parent=1 // pred_region
      _
    $region21: #{tpu_custom_call.1} parent=1 // pred_fallthru
      _
    // Predicated region
    $region22: #{tpu_custom_call.1} parent=1 // pred_check
      _
    $region23: #{tpu_custom_call.1} parent=1 // pred_check_branch
      %23 = sbr.rel (0) target = $region25
    $region24: #{tpu_custom_call.1} parent=1 // pred_region
      %s25 = ssub.s32 16, 16
      %26 = vsyncadd [#allocation3], %s25
      %s28 = sshll.u32 %s5, 4
      %s29 = int_to_ptr.vmem [resolvable:$true] %s28
      %31 = dma.vmem_to_smem %s29, 16, [#allocation2], [#allocation3]
    $region25: #{tpu_custom_call.1} parent=1 // pred_fallthru
      _
    // Predicated region
    $region26: #{tpu_custom_call.1} parent=1 // pred_check
      _
    $region27: #{tpu_custom_call.1} parent=1 // pred_check_branch
      %33 = sbr.rel (0) target = $region29
    $region28: #{tpu_custom_call.1} parent=1 // pred_region
      %34 = dma.done [#allocation3], 16
    $region29: #{tpu_custom_call.1} parent=1 // pred_fallthru
      _
    %35 = sfence
    %v36 = vld [vmem:[%s0] sm:$0xf]
    %v37 = vld [vmem:[%s0 + $0x4] sm:$0xf]
    %v38 = vld [vmem:[%s0 + $0x8] sm:$0xf]
    %v39 = vld [vmem:[%s0 + $0xc] sm:$0xf]
    %v40 = vunpack.c.l.bf16 %v36
    %v41 = vunpack.c.l.bf16 %v37
    %v42 = vunpack.c.l.bf16 %v38
    %v43 = vunpack.c.l.bf16 %v39
    %v44 = vld [vmem:[%s1] sm:$0xff]
    %46 = vset.pattern.permute.xlu0 0
    %47 = vperm.xlu0 %46, %v44
    %v48 = vpop.permute.xlu0 %47
    %v50 = vmul.f32 %v40, %v48
    %v51 = vmul.f32 %v41, %v48
    %v52 = vmul.f32 %v42, %v48
    %v53 = vmul.f32 %v43, %v48
    %vm54 = vcmask 523264
    %v55 = vsel %vm54, %v50, 0.0
    %v56 = vrot.slane %v55, 4
    %v57 = vadd.f32 %v55, %v56
    %v58 = vrot.slane %v57, 2
    %v59 = vadd.f32 %v57, %v58
    %v60 = vrot.slane %v59, 1
    %v61 = vadd.f32 %v59, %v60
    %v62 = vsel %vm54, %v51, 0.0
    %v63 = vrot.slane %v62, 4
    %v64 = vadd.f32 %v62, %v63
    %v65 = vrot.slane %v64, 2
    %v66 = vadd.f32 %v64, %v65
    %v67 = vrot.slane %v66, 1
    %v68 = vadd.f32 %v66, %v67
    %v69 = vsel %vm54, %v52, 0.0
    %v70 = vrot.slane %v69, 4
    %v71 = vadd.f32 %v69, %v70
    %v72 = vrot.slane %v71, 2
    %v73 = vadd.f32 %v71, %v72
    %v74 = vrot.slane %v73, 1
    %v75 = vadd.f32 %v73, %v74
    %v76 = vsel %vm54, %v53, 0.0
    %v77 = vrot.slane %v76, 4
    %v78 = vadd.f32 %v76, %v77
    %v79 = vrot.slane %v78, 2
    %v80 = vadd.f32 %v78, %v79
    %v81 = vrot.slane %v80, 1
    %v82 = vadd.f32 %v80, %v81
    %s83 = sld [smem:[#allocation2]]
    %v84 = vstv %s83
    %v85 = vadd.f32 %v61, %v84
    %v86 = vadd.f32 %v68, %v84
    %v87 = vadd.f32 %v75, %v84
    %v88 = vadd.f32 %v82, %v84
    %v89 = vmax.f32 %v85, 0.0
    %v90 = vmax.f32 %v86, 0.0
    %v91 = vmax.f32 %v87, 0.0
    %v92 = vmax.f32 %v88, 0.0
    %v93 = vld [vmem:[%s2] sm:$0xff]
    %v94 = vld [vmem:[%s2 + $0x8] sm:$0xff]
    %v95 = vld [vmem:[%s2 + $0x10] sm:$0xff]
    %v96 = vld [vmem:[%s2 + $0x18] sm:$0xff]
    %v97 = vld [vmem:[%s2 + $0x20] sm:$0xff]
    %v98 = vld [vmem:[%s2 + $0x28] sm:$0xff]
    %v99 = vld [vmem:[%s2 + $0x30] sm:$0xff]
    %v100 = vld [vmem:[%s2 + $0x38] sm:$0xff]
    %v101 = vld [vmem:[%s3] sm:$0x1]
    %v103 = vlaneseq
    %v104 = vshrl.u32 %v103, 7
    %v105 = vsub.s32 0, %v104
    %v106 = vrot.slane %v101, %v105
    %vm112 = vcmask 1041409
    %v113 = vsel %vm112, %v90, %v89
    %vm114 = vcmask 1042434
    %v115 = vsel %vm114, %v91, %v113
    %vm116 = vcmask 1043459
    %v117 = vsel %vm116, %v92, %v115
    %v118 = vsel %vm54, %v117, 0
    %120 = vmatprep.subr.mxu0 0.0
    %121 = vmatpush1.msra.mxu0 %v93
    %122 = vmatprep.subr.mxu0 0.0
    %123 = vmatpush1.msra.mxu0 %v94
    %124 = vmatprep.subr.mxu0 0.0
    %125 = vmatpush1.msra.mxu0 %v95
    %126 = vmatprep.subr.mxu0 0.0
    %127 = vmatpush1.msra.mxu0 %v96
    %128 = vmatprep.subr.mxu0 0.0
    %129 = vmatpush1.msra.mxu0 %v97
    %130 = vmatprep.subr.mxu0 0.0
    %131 = vmatpush1.msra.mxu0 %v98
    %132 = vmatprep.subr.mxu0 0.0
    %133 = vmatpush1.msra.mxu0 %v99
    %134 = vmatprep.subr.mxu0 0.0
    %135 = vmatpush1.msra.mxu0 %v100
    %136 = vmatprep.subr.mxu0 0.0
    %137 = vmatpush1.msra.mxu0 0.0
    %138 = vmatprep.subr.mxu0 0.0
    %139 = vmatpush1.msra.mxu0 0.0
    %140 = vmatprep.subr.mxu0 0.0
    %141 = vmatpush1.msra.mxu0 0.0
    %142 = vmatprep.subr.mxu0 0.0
    %143 = vmatpush1.msra.mxu0 0.0
    %144 = vmatprep.subr.mxu0 0.0
    %145 = vmatpush1.msra.mxu0 0.0
    %146 = vmatprep.subr.mxu0 0.0
    %147 = vmatpush1.msra.mxu0 0.0
    %148 = vmatprep.subr.mxu0 0.0
    %149 = vmatpush1.msra.mxu0 0.0
    %150 = vmatprep.subr.mxu0 0.0
    %151 = vmatpush1.msra.mxu0 0.0
    %152 = vmatprep.subr.mxu0 0.0
    %153 = vmatpush1.msra.mxu0 0.0
    %154 = vmatprep.subr.mxu0 0.0
    %155 = vmatpush1.msra.mxu0 0.0
    %156 = vmatprep.subr.mxu0 0.0
    %157 = vmatpush1.msra.mxu0 0.0
    %158 = vmatprep.subr.mxu0 0.0
    %159 = vmatpush1.msra.mxu0 0.0
    %160 = vmatprep.subr.mxu0 0.0
    %161 = vmatpush1.msra.mxu0 0.0
    %162 = vmatprep.subr.mxu0 0.0
    %163 = vmatpush1.msra.mxu0 0.0
    %164 = vmatprep.subr.mxu0 0.0
    %165 = vmatpush1.msra.mxu0 0.0
    %166 = vmatprep.subr.mxu0 0.0
    %167 = vmatpush1.msra.mxu0 0.0
    %168 = vmatprep.subr.mxu0 0.0
    %169 = vmatpush1.msra.mxu0 0.0
    %170 = vmatprep.subr.mxu0 0.0
    %171 = vmatpush1.msra.mxu0 0.0
    %172 = vmatprep.subr.mxu0 0.0
    %173 = vmatpush1.msra.mxu0 0.0
    %174 = vmatprep.subr.mxu0 0.0
    %175 = vmatpush1.msra.mxu0 0.0
    %176 = vmatprep.subr.mxu0 0.0
    %177 = vmatpush1.msra.mxu0 0.0
    %178 = vmatprep.subr.mxu0 0.0
    %179 = vmatpush1.msra.mxu0 0.0
    %180 = vmatprep.subr.mxu0 0.0
    %181 = vmatpush1.msra.mxu0 0.0
    %182 = vmatprep.subr.mxu0 0.0
    %183 = vmatpush1.msra.mxu0 0.0
    %184 = vmatprep.mubr.f32.mxu0 0.0
    %185 = vmatmul.mubr.f32.gmra.mrb[0].mxu0 %v118
    %v186 = vpop.f32.mrb[0].mxu0
    %v187 = vadd.f32 %v106, %v186
    %v188 = vpop.f32.mrb[0].mxu0
    %189 = vdwg.mxu0
    %v190 = vmax.f32 %v187, 0.0
    %v191 = vld [vmem:[%s4] sm:$0xff]
    %v192 = vld [vmem:[%s4 + $0x8] sm:$0xff]
    %v193 = vld [vmem:[%s4 + $0x10] sm:$0xff]
    %v194 = vld [vmem:[%s4 + $0x18] sm:$0xff]
    %s195 = sld [smem:[#allocation2 + $0x1]]
    %v196 = vstv %s195
    %vm197 = vcmask 261120
    %v199 = vsel %vm197, %v190, 0
    %201 = vmatprep.subr.mxu0 0.0
    %202 = vmatpush1.msra.mxu0 %v191
    %203 = vmatprep.subr.mxu0 0.0
    %204 = vmatpush1.msra.mxu0 %v192
    %205 = vmatprep.subr.mxu0 0.0
    %206 = vmatpush1.msra.mxu0 %v193
    %207 = vmatprep.subr.mxu0 0.0
    %208 = vmatpush1.msra.mxu0 %v194
    %209 = vmatprep.subr.mxu0 0.0
    %210 = vmatpush1.msra.mxu0 0.0
    %211 = vmatprep.subr.mxu0 0.0
    %212 = vmatpush1.msra.mxu0 0.0
    %213 = vmatprep.subr.mxu0 0.0
    %214 = vmatpush1.msra.mxu0 0.0
    %215 = vmatprep.subr.mxu0 0.0
    %216 = vmatpush1.msra.mxu0 0.0
    %217 = vmatprep.subr.mxu0 0.0
    %218 = vmatpush1.msra.mxu0 0.0
    %219 = vmatprep.subr.mxu0 0.0
    %220 = vmatpush1.msra.mxu0 0.0
    %221 = vmatprep.subr.mxu0 0.0
    %222 = vmatpush1.msra.mxu0 0.0
    %223 = vmatprep.subr.mxu0 0.0
    %224 = vmatpush1.msra.mxu0 0.0
    %225 = vmatprep.subr.mxu0 0.0
    %226 = vmatpush1.msra.mxu0 0.0
    %227 = vmatprep.subr.mxu0 0.0
    %228 = vmatpush1.msra.mxu0 0.0
    %229 = vmatprep.subr.mxu0 0.0
    %230 = vmatpush1.msra.mxu0 0.0
    %231 = vmatprep.subr.mxu0 0.0
    %232 = vmatpush1.msra.mxu0 0.0
    %233 = vmatprep.subr.mxu0 0.0
    %234 = vmatpush1.msra.mxu0 0.0
    %235 = vmatprep.subr.mxu0 0.0
    %236 = vmatpush1.msra.mxu0 0.0
    %237 = vmatprep.subr.mxu0 0.0
    %238 = vmatpush1.msra.mxu0 0.0
    %239 = vmatprep.subr.mxu0 0.0
    %240 = vmatpush1.msra.mxu0 0.0
    %241 = vmatprep.subr.mxu0 0.0
    %242 = vmatpush1.msra.mxu0 0.0
    %243 = vmatprep.subr.mxu0 0.0
    %244 = vmatpush1.msra.mxu0 0.0
    %245 = vmatprep.subr.mxu0 0.0
    %246 = vmatpush1.msra.mxu0 0.0
    %247 = vmatprep.subr.mxu0 0.0
    %248 = vmatpush1.msra.mxu0 0.0
    %249 = vmatprep.subr.mxu0 0.0
    %250 = vmatpush1.msra.mxu0 0.0
    %251 = vmatprep.subr.mxu0 0.0
    %252 = vmatpush1.msra.mxu0 0.0
    %253 = vmatprep.subr.mxu0 0.0
    %254 = vmatpush1.msra.mxu0 0.0
    %255 = vmatprep.subr.mxu0 0.0
    %256 = vmatpush1.msra.mxu0 0.0
    %257 = vmatprep.subr.mxu0 0.0
    %258 = vmatpush1.msra.mxu0 0.0
    %259 = vmatprep.subr.mxu0 0.0
    %260 = vmatpush1.msra.mxu0 0.0
    %261 = vmatprep.subr.mxu0 0.0
    %262 = vmatpush1.msra.mxu0 0.0
    %263 = vmatprep.subr.mxu0 0.0
    %264 = vmatpush1.msra.mxu0 0.0
    %265 = vmatprep.mubr.f32.mxu0 0.0
    %266 = vmatmul.mubr.f32.gmra.mrb[0].mxu0 %v199
    %v267 = vpop.f32.mrb[0].mxu0
    %v268 = vadd.f32 %v196, %v267
    %v269 = vpop.f32.mrb[0].mxu0
    %270 = vdwg.mxu0
    %v271 = vtanh.pop %v268
    %vm272 = vcmask 3072
    %273 = vst.msk [vmem:[%s6] sm:$0xf] %vm272, %v271
    // Predicated region
    $region30: #{tpu_custom_call.1} parent=1 // pred_check
      _
    $region31: #{tpu_custom_call.1} parent=1 // pred_check_branch
      %275 = sbr.rel (0) target = $region33
    $region32: #{tpu_custom_call.1} parent=1 // pred_region
      _
    $region33: #{tpu_custom_call.1} parent=1 // pred_fallthru
      _
    // Predicated region
    $region34: #{tpu_custom_call.1} parent=1 // pred_check
      _
    $region35: #{tpu_custom_call.1} parent=1 // pred_check_branch
      %277 = sbr.rel (0) target = $region37
    $region36: #{tpu_custom_call.1} parent=1 // pred_region
      _
    $region37: #{tpu_custom_call.1} parent=1 // pred_fallthru
      _
    %278 = vsyncpa [#allocation3], 1

</llo_original>
